<compile_context>
chip_gen: v7x
topology: tpu7x:2x2x1
jax: 0.10.0
libtpu: 0.0.40
codegen_flags: <defaults>
</compile_context>

<pallas_src>
import jax
import jax.numpy as jnp
from jax.experimental import pallas as pl
from jax.experimental.pallas import tpu as pltpu


def _round_up(x, m):
    return ((x + m - 1) // m) * m


def _decoder_kernel(x_ref,
                    w1_ref, b1_ref,
                    w2_ref, b2_ref,
                    w3_ref, b3_ref,
                    out_ref):
    # Cast fp32 x -> bf16 in-kernel (hidden under the input DMA).
    x = x_ref[...].astype(jnp.bfloat16)

    # fc1 + ReLU   (bf16 operands on the MXU, fp32 accumulate)
    h = jnp.dot(x, w1_ref[...], preferred_element_type=jnp.float32)
    h = jnp.maximum(h + b1_ref[...], 0.0)

    # fc2 + ReLU
    h = jnp.dot(h.astype(jnp.bfloat16), w2_ref[...],
                preferred_element_type=jnp.float32)
    h = jnp.maximum(h + b2_ref[...], 0.0)

    # fc3 (no activation); output columns are zero-padded to a lane multiple.
    out = jnp.dot(h.astype(jnp.bfloat16), w3_ref[...],
                  preferred_element_type=jnp.float32)
    out_ref[...] = (out + b3_ref[...]).astype(out_ref.dtype)


def prepare_params(params):
    """One-time layout prep (outside the hot path).

    PyTorch (out, in) weights -> (in, out) bf16; biases -> fp32 (1, out).
    fc3 is zero-padded along the output dim up to a multiple of 128 so the
    kernel's output stores are lane-dense (unmasked vst).
    """
    prep = {}
    for name in ("fc1", "fc2", "fc3"):
        w = params[f"{name}_w"].T.astype(jnp.bfloat16)          # (in, out)
        b = params[f"{name}_b"][None, :].astype(jnp.float32)    # (1, out)
        if name == "fc3":
            out_dim = w.shape[1]
            out_pad = _round_up(out_dim, 128)
            if out_pad != out_dim:
                w = jnp.pad(w, ((0, 0), (0, out_pad - out_dim)))
                b = jnp.pad(b, ((0, 0), (0, out_pad - out_dim)))
        prep[f"{name}_w"] = w
        prep[f"{name}_b"] = b
    return prep


def _pick_tile_b(B):
    """Large fixed tiles for per-step-overhead amortization (~0.35us/step).

    Ragged last blocks are fine (Pallas masks them), so no divisor search.
    """
    TILE = 2048
    if B >= 2 * TILE:
        return TILE
    if B >= 1024:
        # Split into (at least) 2 grid steps so both v7x TensorCores get work.
        return _round_up(pl.cdiv(B, 2), 8)
    # Tiny batch: one block, rounded to the 8-sublane granule.
    return _round_up(max(B, 8), 8)


def decoder_forward(x, prep, *, output_dim):
    """x: (B, input_dim) float32. prep: output of prepare_params()."""
    B, input_dim = x.shape
    out_pad = prep["fc3_w"].shape[1]

    tile_b = _pick_tile_b(B)
    grid = (pl.cdiv(B, tile_b),)

    def resident(shape):
        # Same block every grid step -> stays in VMEM, no per-step DMA.
        return pl.BlockSpec(shape, lambda i: tuple(0 for _ in shape))

    out = pl.pallas_call(
        _decoder_kernel,
        out_shape=jax.ShapeDtypeStruct((B, out_pad), jnp.float32),
        grid=grid,
        in_specs=[
            pl.BlockSpec((tile_b, input_dim), lambda i: (i, 0)),
            resident(prep["fc1_w"].shape), resident(prep["fc1_b"].shape),
            resident(prep["fc2_w"].shape), resident(prep["fc2_b"].shape),
            resident(prep["fc3_w"].shape), resident(prep["fc3_b"].shape),
        ],
        out_specs=pl.BlockSpec((tile_b, out_pad), lambda i: (i, 0)),
        compiler_params=pltpu.CompilerParams(
            dimension_semantics=("parallel",),
        ),
    )(x,
      prep["fc1_w"], prep["fc1_b"],
      prep["fc2_w"], prep["fc2_b"],
      prep["fc3_w"], prep["fc3_b"])

    if out_pad != output_dim:
        out = out[:, :output_dim]
    return out


def init_params(key, input_dim, output_dim):
    """Deterministic synthetic init, PyTorch nn.Linear weight convention (out, in)."""
    ks = jax.random.split(key, 6)

    def linear(kw, kb, fan_in, fan_out):
        bound = 1.0 / jnp.sqrt(fan_in)
        w = jax.random.uniform(kw, (fan_out, fan_in), jnp.float32, -bound, bound)
        b = jax.random.uniform(kb, (fan_out,), jnp.float32, -bound, bound)
        return w, b

    fc1_w, fc1_b = linear(ks[0], ks[1], input_dim, 64)
    fc2_w, fc2_b = linear(ks[2], ks[3], 64, 128)
    fc3_w, fc3_b = linear(ks[4], ks[5], 128, output_dim)
    return {
        "fc1_w": fc1_w, "fc1_b": fc1_b,
        "fc2_w": fc2_w, "fc2_b": fc2_b,
        "fc3_w": fc3_w, "fc3_b": fc3_b,
    }


def reference_forward(x, p):
    """Pure-JAX fp32 reference mirroring the PyTorch Decoder."""
    h = jnp.maximum(x @ p["fc1_w"].T + p["fc1_b"], 0.0)
    h = jnp.maximum(h @ p["fc2_w"].T + p["fc2_b"], 0.0)
    return h @ p["fc3_w"].T + p["fc3_b"]


if __name__ == "__main__":
    key = jax.random.PRNGKey(0)
    k_x, k_p = jax.random.split(key)

    B, input_dim, output_dim = 8, 16, 32
    x = jax.random.normal(k_x, (B, input_dim), jnp.float32)
    params = init_params(k_p, input_dim, output_dim)

    prep = prepare_params(params)              # one-time weight layout prep
    fwd = jax.jit(decoder_forward, static_argnames=("output_dim",))

    out = fwd(x, prep, output_dim=output_dim)
    jax.block_until_ready(out)

    ref = reference_forward(x, params)
    assert out.shape == ref.shape, "decoder output shape mismatch"
    # bf16 matmul operands (fp32 accumulation) -> loosened tolerance vs. fp32 ref.
    assert jnp.allclose(out, ref, atol=5e-2, rtol=5e-2), "decoder output mismatch"

    print("KERNEL_OK")
</pallas_src>

<mosaic_0001>
module attributes {stable_mosaic.version = 11 : i64} {
  func.func @_decoder_kernel(%arg0: i32, %arg1: memref<8x16xf32, #tpu.memory_space<vmem>>, %arg2: memref<16x64xbf16, #tpu.memory_space<vmem>>, %arg3: memref<1x64xf32, #tpu.memory_space<vmem>>, %arg4: memref<64x128xbf16, #tpu.memory_space<vmem>>, %arg5: memref<1x128xf32, #tpu.memory_space<vmem>>, %arg6: memref<128x128xbf16, #tpu.memory_space<vmem>>, %arg7: memref<1x128xf32, #tpu.memory_space<vmem>>, %arg8: memref<8x128xf32, #tpu.memory_space<vmem>>) attributes {dimension_semantics = [#tpu.dimension_semantics<parallel>], iteration_bounds = array<i64: 1>, scalar_prefetch = 0 : i64, scratch_operands = 0 : i64, tpu.core_type = #tpu.core_type<tc>, window_params = [{transform_indices = @transform_0, window_bounds = array<i64: 8, 16>}, {pipeline_mode = #tpu.pipeline_mode<synchronous>, transform_indices = @transform_1, window_bounds = array<i64: 16, 64>}, {pipeline_mode = #tpu.pipeline_mode<synchronous>, transform_indices = @transform_2, window_bounds = array<i64: 1, 64>}, {pipeline_mode = #tpu.pipeline_mode<synchronous>, transform_indices = @transform_3, window_bounds = array<i64: 64, 128>}, {pipeline_mode = #tpu.pipeline_mode<synchronous>, transform_indices = @transform_4, window_bounds = array<i64: 1, 128>}, {pipeline_mode = #tpu.pipeline_mode<synchronous>, transform_indices = @transform_5, window_bounds = array<i64: 128, 128>}, {pipeline_mode = #tpu.pipeline_mode<synchronous>, transform_indices = @transform_6, window_bounds = array<i64: 1, 128>}, {transform_indices = @transform_7, window_bounds = array<i64: 8, 128>}]} {
    %c0 = arith.constant 0 : index
    %c0_0 = arith.constant 0 : index
    %0 = vector.load %arg1[%c0, %c0_0] : memref<8x16xf32, #tpu.memory_space<vmem>>, vector<8x16xf32>
    %1 = arith.truncf %0 : vector<8x16xf32> to vector<8x16xbf16>
    %c0_1 = arith.constant 0 : index
    %c0_2 = arith.constant 0 : index
    %2 = vector.load %arg2[%c0_1, %c0_2] : memref<16x64xbf16, #tpu.memory_space<vmem>>, vector<16x64xbf16>
    %cst = arith.constant dense<0.000000e+00> : vector<8x64xf32>
    %3 = tpu.matmul %1, %2, %cst {dimension_numbers = #tpu.dot_dimension_numbers<[1], [0], [0], [1], [0, 0, 1, 1], [], []>} : vector<8x16xbf16>, vector<16x64xbf16>, vector<8x64xf32> -> vector<8x64xf32>
    %c0_3 = arith.constant 0 : index
    %c0_4 = arith.constant 0 : index
    %4 = vector.load %arg3[%c0_3, %c0_4] : memref<1x64xf32, #tpu.memory_space<vmem>>, vector<1x64xf32>
    %5 = vector.broadcast %4 : vector<1x64xf32> to vector<8x64xf32>
    %6 = arith.addf %3, %5 : vector<8x64xf32>
    %cst_5 = arith.constant 0.000000e+00 : f32
    %7 = vector.broadcast %cst_5 : f32 to vector<8x64xf32>
    %8 = arith.maximumf %6, %7 : vector<8x64xf32>
    %9 = arith.truncf %8 : vector<8x64xf32> to vector<8x64xbf16>
    %c0_6 = arith.constant 0 : index
    %c0_7 = arith.constant 0 : index
    %10 = vector.load %arg4[%c0_6, %c0_7] : memref<64x128xbf16, #tpu.memory_space<vmem>>, vector<64x128xbf16>
    %cst_8 = arith.constant dense<0.000000e+00> : vector<8x128xf32>
    %11 = tpu.matmul %9, %10, %cst_8 {dimension_numbers = #tpu.dot_dimension_numbers<[1], [0], [0], [1], [0, 0, 1, 1], [], []>} : vector<8x64xbf16>, vector<64x128xbf16>, vector<8x128xf32> -> vector<8x128xf32>
    %c0_9 = arith.constant 0 : index
    %c0_10 = arith.constant 0 : index
    %12 = vector.load %arg5[%c0_9, %c0_10] : memref<1x128xf32, #tpu.memory_space<vmem>>, vector<1x128xf32>
    %13 = vector.broadcast %12 : vector<1x128xf32> to vector<8x128xf32>
    %14 = arith.addf %11, %13 : vector<8x128xf32>
    %cst_11 = arith.constant 0.000000e+00 : f32
    %15 = vector.broadcast %cst_11 : f32 to vector<8x128xf32>
    %16 = arith.maximumf %14, %15 : vector<8x128xf32>
    %17 = arith.truncf %16 : vector<8x128xf32> to vector<8x128xbf16>
    %c0_12 = arith.constant 0 : index
    %c0_13 = arith.constant 0 : index
    %18 = vector.load %arg6[%c0_12, %c0_13] : memref<128x128xbf16, #tpu.memory_space<vmem>>, vector<128x128xbf16>
    %cst_14 = arith.constant dense<0.000000e+00> : vector<8x128xf32>
    %19 = tpu.matmul %17, %18, %cst_14 {dimension_numbers = #tpu.dot_dimension_numbers<[1], [0], [0], [1], [0, 0, 1, 1], [], []>} : vector<8x128xbf16>, vector<128x128xbf16>, vector<8x128xf32> -> vector<8x128xf32>
    %c0_15 = arith.constant 0 : index
    %c0_16 = arith.constant 0 : index
    %20 = vector.load %arg7[%c0_15, %c0_16] : memref<1x128xf32, #tpu.memory_space<vmem>>, vector<1x128xf32>
    %21 = vector.broadcast %20 : vector<1x128xf32> to vector<8x128xf32>
    %22 = arith.addf %19, %21 : vector<8x128xf32>
    %c0_17 = arith.constant 0 : index
    %c0_18 = arith.constant 0 : index
    %23 = vector.load %arg8[%c0_17, %c0_18] : memref<8x128xf32, #tpu.memory_space<vmem>>, vector<8x128xf32>
    tpu.vector_store %arg8[%c0_17, %c0_18], %22 {strides = array<i32>} : memref<8x128xf32, #tpu.memory_space<vmem>>, vector<8x128xf32>,
    return
  }
  func.func @transform_0(%arg0: i32) -> (i32, i32) {
    %c0_i32 = arith.constant 0 : i32
    %c0_i32_0 = arith.constant 0 : i32
    return %arg0, %c0_i32 : i32, i32
  }
  func.func @transform_1(%arg0: i32) -> (i32, i32) {
    %c0_i32 = arith.constant 0 : i32
    %c0_i32_0 = arith.constant 0 : i32
    %c0_i32_1 = arith.constant 0 : i32
    return %c0_i32, %c0_i32_0 : i32, i32
  }
  func.func @transform_2(%arg0: i32) -> (i32, i32) {
    %c0_i32 = arith.constant 0 : i32
    %c0_i32_0 = arith.constant 0 : i32
    %c0_i32_1 = arith.constant 0 : i32
    return %c0_i32, %c0_i32_0 : i32, i32
  }
  func.func @transform_3(%arg0: i32) -> (i32, i32) {
    %c0_i32 = arith.constant 0 : i32
    %c0_i32_0 = arith.constant 0 : i32
    %c0_i32_1 = arith.constant 0 : i32
    return %c0_i32, %c0_i32_0 : i32, i32
  }
  func.func @transform_4(%arg0: i32) -> (i32, i32) {
    %c0_i32 = arith.constant 0 : i32
    %c0_i32_0 = arith.constant 0 : i32
    %c0_i32_1 = arith.constant 0 : i32
    return %c0_i32, %c0_i32_0 : i32, i32
  }
  func.func @transform_5(%arg0: i32) -> (i32, i32) {
    %c0_i32 = arith.constant 0 : i32
    %c0_i32_0 = arith.constant 0 : i32
    %c0_i32_1 = arith.constant 0 : i32
    return %c0_i32, %c0_i32_0 : i32, i32
  }
  func.func @transform_6(%arg0: i32) -> (i32, i32) {
    %c0_i32 = arith.constant 0 : i32
    %c0_i32_0 = arith.constant 0 : i32
    %c0_i32_1 = arith.constant 0 : i32
    return %c0_i32, %c0_i32_0 : i32, i32
  }
  func.func @transform_7(%arg0: i32) -> (i32, i32) {
    %c0_i32 = arith.constant 0 : i32
    %c0_i32_0 = arith.constant 0 : i32
    return %arg0, %c0_i32 : i32, i32
  }
}

</mosaic_0001>

<llo_original>
// kernel: decoder_forward.1
$region0: #{decoder_forward.1}
  #allocation0 [shape = 'u32[]', space=smem, size = 0x4, offset = 0x4, fixed_abs, tag = 'smem constant byte address 0x4 - core index']
  #allocation1 [shape = 'u32[144,128]{1,0:T(1,128)}', space=vmem, size = 0x12000, scoped, tag = 'internal scratch']
  %s0 = inlined_call_operand.hbm [shape: f32[8,16], index: 0, kind: input, shape index: {}]
  %s1 = inlined_call_operand.hbm [shape: bf16[16,64], index: 1, kind: input, shape index: {}]
  %s2 = inlined_call_operand.vmem [shape: f32[1,64], index: 2, kind: input, shape index: {}]
  %s3 = inlined_call_operand.hbm [shape: bf16[64,128], index: 3, kind: input, shape index: {}]
  %s4 = inlined_call_operand.vmem [shape: f32[1,128], index: 4, kind: input, shape index: {}]
  %s5 = inlined_call_operand.hbm [shape: bf16[128,128], index: 5, kind: input, shape index: {}]
  %s6 = inlined_call_operand.vmem [shape: f32[1,128], index: 6, kind: input, shape index: {}]
  %s7 = inlined_call_operand.hbm [shape: f32[8,128], index: 7, kind: output, shape index: {}]
  %s8 = sld [smem:[#allocation0]]
  $region54: #{decoder_forward.1} parent=0
    _
  %s10 = ssub.s32 1, %s8
  %s11 = scalar_select 0, %s10, %s8
  $region1: #{decoder_forward.1} parent=0
    #allocation2 [shape = 'u8[4096]{0}', space=vmem, size = 0x1000, scoped, tag = 'input window, operand 0, single buffered']
    #allocation3 [shape = 's32[1]{0}', space=sflag, size = 0x4, scoped, tag = 'scoped memory for decoder_forward.1']
    #allocation4 [shape = 's32[1]{0}', space=sflag, size = 0x4, scoped, tag = 'scoped memory for decoder_forward.1']
    #allocation5 [shape = 'u8[4096]{0}', space=vmem, size = 0x1000, scoped, tag = 'input window, operand 1, single buffered']
    #allocation6 [shape = 's32[1]{0}', space=sflag, size = 0x4, scoped, tag = 'scoped memory for decoder_forward.1']
    #allocation7 [shape = 'u8[16384]{0}', space=vmem, size = 0x4000, scoped, tag = 'input window, operand 3, single buffered']
    #allocation8 [shape = 'u8[32768]{0}', space=vmem, size = 0x8000, scoped, tag = 'input window, operand 5, single buffered']
    #allocation9 [shape = 's32[1]{0}', space=sflag, size = 0x4, scoped, tag = 'scoped memory for decoder_forward.1']
    #allocation10 [shape = 'u8[4096]{0}', space=vmem, size = 0x1000, scoped, tag = 'output window, operand 0, single buffered']
    %12 = vsyncpa [#allocation3], 0
    %13 = vsyncpa [#allocation6], 0
    %14 = vsyncpa [#allocation9], 0
    %15 = vsyncpa [#allocation4], 0
    // Predicated region
    $region2: #{decoder_forward.1} parent=1 // pred_check
      _
    $region3: #{decoder_forward.1} parent=1 // pred_check_branch
      %17 = sbr.rel (0) target = $region5
    $region4: #{decoder_forward.1} parent=1 // pred_region
      %s19 = ssub.s32 128, 128
      %20 = vsyncadd [#allocation3], %s19
      %s22 = sshll.u32 [#allocation2], 4
      %s23 = int_to_ptr.vmem [resolvable:$true] %s22
      %25 = dma.hbm_to_vmem [thread:$0]  %s0, 128, %s23, [#allocation3]
    $region5: #{decoder_forward.1} parent=1 // pred_fallthru
      _
    // Predicated region
    $region6: #{decoder_forward.1} parent=1 // pred_check
      _
    $region7: #{decoder_forward.1} parent=1 // pred_check_branch
      %27 = sbr.rel (0) target = $region9
    $region8: #{decoder_forward.1} parent=1 // pred_region
      %s29 = ssub.s32 128, 128
      %30 = vsyncadd [#allocation6], %s29
      %s31 = sshll.u32 [#allocation5], 4
      %s32 = int_to_ptr.vmem [resolvable:$true] %s31
      %37 = dma.hbm_to_vmem [thread:$0]  %s1, 128, %s32, [#allocation6], 64, 64, 4
    $region9: #{decoder_forward.1} parent=1 // pred_fallthru
      _
    // Predicated region
    $region10: #{decoder_forward.1} parent=1 // pred_check
      _
    $region11: #{decoder_forward.1} parent=1 // pred_check_branch
      %39 = sbr.rel (0) target = $region13
    $region12: #{decoder_forward.1} parent=1 // pred_region
      _
    $region13: #{decoder_forward.1} parent=1 // pred_fallthru
      _
    // Predicated region
    $region14: #{decoder_forward.1} parent=1 // pred_check
      _
    $region15: #{decoder_forward.1} parent=1 // pred_check_branch
      %41 = sbr.rel (0) target = $region17
    $region16: #{decoder_forward.1} parent=1 // pred_region
      %s43 = ssub.s32 512, 512
      %44 = vsyncadd [#allocation6], %s43
      %s45 = sshll.u32 [#allocation7], 4
      %s46 = int_to_ptr.vmem [resolvable:$true] %s45
      %51 = dma.hbm_to_vmem [thread:$0]  %s3, 512, %s46, [#allocation6], 64, 64, 4
    $region17: #{decoder_forward.1} parent=1 // pred_fallthru
      _
    // Predicated region
    $region18: #{decoder_forward.1} parent=1 // pred_check
      _
    $region19: #{decoder_forward.1} parent=1 // pred_check_branch
      %53 = sbr.rel (0) target = $region21
    $region20: #{decoder_forward.1} parent=1 // pred_region
      _
    $region21: #{decoder_forward.1} parent=1 // pred_fallthru
      _
    // Predicated region
    $region22: #{decoder_forward.1} parent=1 // pred_check
      _
    $region23: #{decoder_forward.1} parent=1 // pred_check_branch
      %55 = sbr.rel (0) target = $region25
    $region24: #{decoder_forward.1} parent=1 // pred_region
      %s57 = ssub.s32 1024, 1024
      %58 = vsyncadd [#allocation9], %s57
      %s59 = sshll.u32 [#allocation8], 4
      %s60 = int_to_ptr.vmem [resolvable:$true] %s59
      %65 = dma.hbm_to_vmem [thread:$0]  %s5, 1024, %s60, [#allocation9], 64, 64, 4
    $region25: #{decoder_forward.1} parent=1 // pred_fallthru
      _
    // Predicated region
    $region26: #{decoder_forward.1} parent=1 // pred_check
      _
    $region27: #{decoder_forward.1} parent=1 // pred_check_branch
      %67 = sbr.rel (0) target = $region29
    $region28: #{decoder_forward.1} parent=1 // pred_region
      _
    $region29: #{decoder_forward.1} parent=1 // pred_fallthru
      _
    // Predicated region
    $region30: #{decoder_forward.1} parent=1 // pred_check
      _
    $region31: #{decoder_forward.1} parent=1 // pred_check_branch
      %69 = sbr.rel (0) target = $region33
    $region32: #{decoder_forward.1} parent=1 // pred_region
      %70 = dma.done [#allocation3], 128
    $region33: #{decoder_forward.1} parent=1 // pred_fallthru
      _
    // Predicated region
    $region34: #{decoder_forward.1} parent=1 // pred_check
      _
    $region35: #{decoder_forward.1} parent=1 // pred_check_branch
      %72 = sbr.rel (0) target = $region37
    $region36: #{decoder_forward.1} parent=1 // pred_region
      %73 = dma.done [#allocation6], 128
    $region37: #{decoder_forward.1} parent=1 // pred_fallthru
      _
    // Predicated region
    $region38: #{decoder_forward.1} parent=1 // pred_check
      _
    $region39: #{decoder_forward.1} parent=1 // pred_check_branch
      %75 = sbr.rel (0) target = $region41
    $region40: #{decoder_forward.1} parent=1 // pred_region
      %76 = dma.done [#allocation6], 512
    $region41: #{decoder_forward.1} parent=1 // pred_fallthru
      _
    // Predicated region
    $region42: #{decoder_forward.1} parent=1 // pred_check
      _
    $region43: #{decoder_forward.1} parent=1 // pred_check_branch
      %78 = sbr.rel (0) target = $region45
    $region44: #{decoder_forward.1} parent=1 // pred_region
      %79 = dma.done [#allocation9], 1024
    $region45: #{decoder_forward.1} parent=1 // pred_fallthru
      _
    %v81 = vld [vmem:[#allocation2] sm:$0xff]
    %v82 = vpack.c.bf16 %v81, %v81
    %v83 = vld [vmem:[#allocation5] sm:$0xf]
    %v84 = vld [vmem:[#allocation5 + $0x4] sm:$0xf]
    %v85 = vld [vmem:[%s2] sm:$0x1]
    %v87 = vlaneseq
    %v88 = vshrl.u32 %v87, 7
    %v89 = vsub.s32 0, %v88
    %v90 = vrot.slane %v85, %v89
    %v94 = vunpack.c.l.b16 %v83
    %v95 = vunpack.c.l.b16 %v84
    %v96 = vpack.c.b16 %v95, %v94
    %vm98 = vcmask 130048
    %v100 = vsel %vm98, %v82, 0
    %102 = vmatprep.subr.bf16.mxu0 0
    %103 = vmatpush1.bf16.msra.mxu0 %v96
    %104 = vmatprep.subr.bf16.mxu0 0
    %105 = vmatpush1.bf16.msra.mxu0 0
    %106 = vmatprep.subr.bf16.mxu0 0
    %107 = vmatpush1.bf16.msra.mxu0 0
    %108 = vmatprep.subr.bf16.mxu0 0
    %109 = vmatpush1.bf16.msra.mxu0 0
    %110 = vmatprep.subr.bf16.mxu0 0
    %111 = vmatpush1.bf16.msra.mxu0 0
    %112 = vmatprep.subr.bf16.mxu0 0
    %113 = vmatpush1.bf16.msra.mxu0 0
    %114 = vmatprep.subr.bf16.mxu0 0
    %115 = vmatpush1.bf16.msra.mxu0 0
    %116 = vmatprep.subr.bf16.mxu0 0
    %117 = vmatpush1.bf16.msra.mxu0 0
    %118 = vmatprep.subr.bf16.mxu0 0
    %119 = vmatpush1.bf16.msra.mxu0 0
    %120 = vmatprep.subr.bf16.mxu0 0
    %121 = vmatpush1.bf16.msra.mxu0 0
    %122 = vmatprep.subr.bf16.mxu0 0
    %123 = vmatpush1.bf16.msra.mxu0 0
    %124 = vmatprep.subr.bf16.mxu0 0
    %125 = vmatpush1.bf16.msra.mxu0 0
    %126 = vmatprep.subr.bf16.mxu0 0
    %127 = vmatpush1.bf16.msra.mxu0 0
    %128 = vmatprep.subr.bf16.mxu0 0
    %129 = vmatpush1.bf16.msra.mxu0 0
    %130 = vmatprep.subr.bf16.mxu0 0
    %131 = vmatpush1.bf16.msra.mxu0 0
    %132 = vmatprep.subr.bf16.mxu0 0
    %133 = vmatpush1.bf16.msra.mxu0 0
    %134 = vmatprep.mubr.bf16.mxu0 0
    %135 = vmatmul.mubr.bf16.gmra.mrb[0].mxu0 %v100
    %v136 = vpop.f32.mrb[0].mxu0
    %v137 = vadd.f32 %v90, %v136
    %v138 = vpop.f32.mrb[0].mxu0
    %v139 = vpop.f32.mrb[0].mxu0
    %v140 = vpop.f32.mrb[0].mxu0
    %141 = vdwg.mxu0
    %v142 = vmax.f32 %v137, 0.0
    %v143 = vpack.c.bf16 %v142, %v142
    %v144 = vld [vmem:[#allocation7] sm:$0xf]
    %v145 = vld [vmem:[#allocation7 + $0x4] sm:$0xf]
    %v146 = vld [vmem:[#allocation7 + $0x8] sm:$0xf]
    %v147 = vld [vmem:[#allocation7 + $0xc] sm:$0xf]
    %v148 = vld [vmem:[#allocation7 + $0x10] sm:$0xf]
    %v149 = vld [vmem:[#allocation7 + $0x14] sm:$0xf]
    %v150 = vld [vmem:[#allocation7 + $0x18] sm:$0xf]
    %v151 = vld [vmem:[#allocation7 + $0x1c] sm:$0xf]
    %v152 = vld [vmem:[%s4] sm:$0x1]
    %v154 = vlaneseq
    %v155 = vshrl.u32 %v154, 7
    %v156 = vsub.s32 0, %v155
    %v157 = vrot.slane %v152, %v156
    %v167 = vunpack.c.l.b16 %v144
    %v168 = vunpack.c.l.b16 %v145
    %v169 = vunpack.c.l.b16 %v146
    %v170 = vunpack.c.l.b16 %v147
    %v171 = vunpack.c.l.b16 %v148
    %v172 = vunpack.c.l.b16 %v149
    %v173 = vunpack.c.l.b16 %v150
    %v174 = vunpack.c.l.b16 %v151
    %v175 = vpack.c.b16 %v168, %v167
    %v176 = vpack.c.b16 %v170, %v169
    %v177 = vpack.c.b16 %v172, %v171
    %v178 = vpack.c.b16 %v174, %v173
    %vm183 = vcmask 523264
    %v185 = vsel %vm183, %v143, 0
    %187 = vmatprep.subr.bf16.mxu0 0
    %188 = vmatpush1.bf16.msra.mxu0 %v175
    %189 = vmatprep.subr.bf16.mxu0 0
    %190 = vmatpush1.bf16.msra.mxu0 %v176
    %191 = vmatprep.subr.bf16.mxu0 0
    %192 = vmatpush1.bf16.msra.mxu0 %v177
    %193 = vmatprep.subr.bf16.mxu0 0
    %194 = vmatpush1.bf16.msra.mxu0 %v178
    %195 = vmatprep.subr.bf16.mxu0 0
    %196 = vmatpush1.bf16.msra.mxu0 0
    %197 = vmatprep.subr.bf16.mxu0 0
    %198 = vmatpush1.bf16.msra.mxu0 0
    %199 = vmatprep.subr.bf16.mxu0 0
    %200 = vmatpush1.bf16.msra.mxu0 0
    %201 = vmatprep.subr.bf16.mxu0 0
    %202 = vmatpush1.bf16.msra.mxu0 0
    %203 = vmatprep.subr.bf16.mxu0 0
    %204 = vmatpush1.bf16.msra.mxu0 0
    %205 = vmatprep.subr.bf16.mxu0 0
    %206 = vmatpush1.bf16.msra.mxu0 0
    %207 = vmatprep.subr.bf16.mxu0 0
    %208 = vmatpush1.bf16.msra.mxu0 0
    %209 = vmatprep.subr.bf16.mxu0 0
    %210 = vmatpush1.bf16.msra.mxu0 0
    %211 = vmatprep.subr.bf16.mxu0 0
    %212 = vmatpush1.bf16.msra.mxu0 0
    %213 = vmatprep.subr.bf16.mxu0 0
    %214 = vmatpush1.bf16.msra.mxu0 0
    %215 = vmatprep.subr.bf16.mxu0 0
    %216 = vmatpush1.bf16.msra.mxu0 0
    %217 = vmatprep.subr.bf16.mxu0 0
    %218 = vmatpush1.bf16.msra.mxu0 0
    %219 = vmatprep.mubr.bf16.mxu0 0
    %220 = vmatmul.mubr.bf16.gmra.mrb[0].mxu0 %v185
    %v221 = vpop.f32.mrb[0].mxu0
    %v222 = vadd.f32 %v157, %v221
    %v223 = vpop.f32.mrb[0].mxu0
    %v224 = vpop.f32.mrb[0].mxu0
    %v225 = vpop.f32.mrb[0].mxu0
    %226 = vdwg.mxu0
    %v227 = vmax.f32 %v222, 0.0
    %v228 = vpack.c.bf16 %v227, %v227
    %v229 = vld [vmem:[#allocation8] sm:$0xf]
    %v230 = vld [vmem:[#allocation8 + $0x4] sm:$0xf]
    %v231 = vld [vmem:[#allocation8 + $0x8] sm:$0xf]
    %v232 = vld [vmem:[#allocation8 + $0xc] sm:$0xf]
    %v233 = vld [vmem:[#allocation8 + $0x10] sm:$0xf]
    %v234 = vld [vmem:[#allocation8 + $0x14] sm:$0xf]
    %v235 = vld [vmem:[#allocation8 + $0x18] sm:$0xf]
    %v236 = vld [vmem:[#allocation8 + $0x1c] sm:$0xf]
    %v237 = vld [vmem:[#allocation8 + $0x20] sm:$0xf]
    %v238 = vld [vmem:[#allocation8 + $0x24] sm:$0xf]
    %v239 = vld [vmem:[#allocation8 + $0x28] sm:$0xf]
    %v240 = vld [vmem:[#allocation8 + $0x2c] sm:$0xf]
    %v241 = vld [vmem:[#allocation8 + $0x30] sm:$0xf]
    %v242 = vld [vmem:[#allocation8 + $0x34] sm:$0xf]
    %v243 = vld [vmem:[#allocation8 + $0x38] sm:$0xf]
    %v244 = vld [vmem:[#allocation8 + $0x3c] sm:$0xf]
    %v245 = vld [vmem:[%s6] sm:$0x1]
    %v247 = vlaneseq
    %v248 = vshrl.u32 %v247, 7
    %v249 = vsub.s32 0, %v248
    %v250 = vrot.slane %v245, %v249
    %v268 = vunpack.c.l.b16 %v229
    %v269 = vunpack.c.l.b16 %v230
    %v270 = vunpack.c.l.b16 %v231
    %v271 = vunpack.c.l.b16 %v232
    %v272 = vunpack.c.l.b16 %v233
    %v273 = vunpack.c.l.b16 %v234
    %v274 = vunpack.c.l.b16 %v235
    %v275 = vunpack.c.l.b16 %v236
    %v276 = vunpack.c.l.b16 %v237
    %v277 = vunpack.c.l.b16 %v238
    %v278 = vunpack.c.l.b16 %v239
    %v279 = vunpack.c.l.b16 %v240
    %v280 = vunpack.c.l.b16 %v241
    %v281 = vunpack.c.l.b16 %v242
    %v282 = vunpack.c.l.b16 %v243
    %v283 = vunpack.c.l.b16 %v244
    %v284 = vpack.c.b16 %v269, %v268
    %v285 = vpack.c.b16 %v271, %v270
    %v286 = vpack.c.b16 %v273, %v272
    %v287 = vpack.c.b16 %v275, %v274
    %v288 = vpack.c.b16 %v277, %v276
    %v289 = vpack.c.b16 %v279, %v278
    %v290 = vpack.c.b16 %v281, %v280
    %v291 = vpack.c.b16 %v283, %v282
    %300 = vmatprep.subr.bf16.mxu0 0
    %301 = vmatpush1.bf16.msra.mxu0 %v284
    %302 = vmatprep.subr.bf16.mxu0 0
    %303 = vmatpush1.bf16.msra.mxu0 %v285
    %304 = vmatprep.subr.bf16.mxu0 0
    %305 = vmatpush1.bf16.msra.mxu0 %v286
    %306 = vmatprep.subr.bf16.mxu0 0
    %307 = vmatpush1.bf16.msra.mxu0 %v287
    %308 = vmatprep.subr.bf16.mxu0 0
    %309 = vmatpush1.bf16.msra.mxu0 %v288
    %310 = vmatprep.subr.bf16.mxu0 0
    %311 = vmatpush1.bf16.msra.mxu0 %v289
    %312 = vmatprep.subr.bf16.mxu0 0
    %313 = vmatpush1.bf16.msra.mxu0 %v290
    %314 = vmatprep.subr.bf16.mxu0 0
    %315 = vmatpush1.bf16.msra.mxu0 %v291
    %316 = vmatprep.subr.bf16.mxu0 0
    %317 = vmatpush1.bf16.msra.mxu0 0
    %318 = vmatprep.subr.bf16.mxu0 0
    %319 = vmatpush1.bf16.msra.mxu0 0
    %320 = vmatprep.subr.bf16.mxu0 0
    %321 = vmatpush1.bf16.msra.mxu0 0
    %322 = vmatprep.subr.bf16.mxu0 0
    %323 = vmatpush1.bf16.msra.mxu0 0
    %324 = vmatprep.subr.bf16.mxu0 0
    %325 = vmatpush1.bf16.msra.mxu0 0
    %326 = vmatprep.subr.bf16.mxu0 0
    %327 = vmatpush1.bf16.msra.mxu0 0
    %328 = vmatprep.subr.bf16.mxu0 0
    %329 = vmatpush1.bf16.msra.mxu0 0
    %330 = vmatprep.subr.bf16.mxu0 0
    %331 = vmatpush1.bf16.msra.mxu0 0
    %332 = vmatprep.mubr.bf16.mxu0 0
    %333 = vmatmul.mubr.bf16.gmra.mrb[0].mxu0 %v228
    %v334 = vpop.f32.mrb[0].mxu0
    %v335 = vadd.f32 %v250, %v334
    %v336 = vpop.f32.mrb[0].mxu0
    %v337 = vpop.f32.mrb[0].mxu0
    %v338 = vpop.f32.mrb[0].mxu0
    %339 = vdwg.mxu0
    %340 = vst [vmem:[#allocation10] sm:$0xff] %v335
    // Predicated region
    $region46: #{decoder_forward.1} parent=1 // pred_check
      _
    $region47: #{decoder_forward.1} parent=1 // pred_check_branch
      %342 = sbr.rel (0) target = $region49
    $region48: #{decoder_forward.1} parent=1 // pred_region
      %s344 = ssub.s32 128, 128
      %345 = vsyncadd [#allocation4], %s344
      %s347 = sshll.u32 [#allocation10], 4
      %s348 = int_to_ptr.vmem [resolvable:$true] %s347
      %350 = dma.vmem_to_hbm [thread:$0]  %s348, 128, %s7, [#allocation4]
    $region49: #{decoder_forward.1} parent=1 // pred_fallthru
      _
    // Predicated region
    $region50: #{decoder_forward.1} parent=1 // pred_check
      _
    $region51: #{decoder_forward.1} parent=1 // pred_check_branch
      %352 = sbr.rel (0) target = $region53
    $region52: #{decoder_forward.1} parent=1 // pred_region
      %353 = dma.done [#allocation4], 128
    $region53: #{decoder_forward.1} parent=1 // pred_fallthru
      _
    %354 = vsyncpa [#allocation3], 1
    %355 = vsyncpa [#allocation6], 1
    %356 = vsyncpa [#allocation9], 1
    %357 = vsyncpa [#allocation4], 1

</llo_original>
